<compile_context>
chip_gen: v6e
topology: v6e:2x2x1
jax: 0.10.0
libtpu: 0.0.40
codegen_flags: <defaults>
</compile_context>

<pallas_src>
import jax
import jax.numpy as jnp
import numpy as np
from jax import lax
from jax.experimental import pallas as pl
from jax.experimental.pallas import tpu as pltpu

PRIMITIVES = ("none", "skip_connect", "conv_3x3", "conv_5x5",
              "max_pool_3x3", "avg_pool_3x3")

# "minus infinity" for masked max-pool taps; it can never survive because the
# centre tap of every 3x3 window is always in-bounds (so no alpha * -inf NaNs).
_NEG = -1e30

_OFFSETS = tuple((dy, dx) for dy in range(-2, 3) for dx in range(-2, 3))
_POOL_OFFSETS = tuple((dy, dx) for (dy, dx) in _OFFSETS
                      if abs(dy) <= 1 and abs(dx) <= 1 and (dy, dx) != (0, 0))


def _tensorcores_per_device():
  """2 on v7x (two TensorCores share a chip), else 1 (v5e/v6e)."""
  try:
    kind = (getattr(jax.devices()[0], "device_kind", "") or "").lower()
    if "v7" in kind:
      return 2
  except Exception:
    pass
  return 1


def _pick_nb(N, C, n_cores):
  """Images per grid step: dense 8-sublane tiles vs. >= n_cores grid steps."""
  divisors = [d for d in range(1, N + 1) if N % d == 0]
  want_steps = min(n_cores, N)
  dense = lambda d: d * C >= 8            # fill the 8 sublane rows
  cores = lambda d: (N // d) >= want_steps
  both = [d for d in divisors if dense(d) and cores(d)]
  if both:
    return min(both)
  if n_cores > 1:
    only_cores = [d for d in divisors if cores(d)]
    if only_cores:
      return max(only_cores)              # v7x: keep both TensorCores busy
  only_dense = [d for d in divisors if dense(d)]
  return min(only_dense) if only_dense else N


def _build_masks(H, W, NBC):
  """(25+8, NBC, HW) f32: multiplicative conv masks, then additive pool masks."""
  HW = H * W
  ys, xs = np.divmod(np.arange(HW, dtype=np.int64), W)
  conv_rows, pool_rows = [], []
  for (dy, dx) in _OFFSETS:
    valid = ((ys + dy >= 0) & (ys + dy < H) & (xs + dx >= 0) & (xs + dx < W))
    conv_rows.append(valid.astype(np.float32))
    if (dy, dx) in _POOL_OFFSETS:
      pool_rows.append(np.where(valid, 0.0, _NEG).astype(np.float32))
  m = np.stack(conv_rows + pool_rows, axis=0)                       # (33, HW)
  m = np.broadcast_to(m[:, None, :], (m.shape[0], NBC, HW)).copy()  # pre-broadcast
  return jnp.asarray(m)


def _make_mixed_op_kernel(H, W, C, NB):
  """Builds the fused kernel for one dense (NB*C, H*W) tile."""
  HW = H * W
  NBC = NB * C

  def kernel(alpha_ref, masks_ref, x_ref, w_ref, out_ref, stack_ref):
    # alpha_ref : SMEM (1,)               max-pool architecture weight
    # masks_ref : VMEM (33, NBC, HW) f32  rows 0..24 conv masks, 25..32 pool masks
    # x_ref     : VMEM (NBC, HW)          dense batch*channel tile (lanes = H*W)
    # w_ref     : VMEM (NBC, 25*NBC)      folded 2-D weight slab (block-diag in NB)
    # out_ref   : VMEM (NBC, HW)
    # stack_ref : VMEM (25*NBC, HW)       im2col-style stacked taps (scratch)
    x = x_ref[...]
    mp = x.astype(jnp.float32)            # max-pool running max (centre tap)
    k = 0
    for t, (dy, dx) in enumerate(_OFFSETS):
      if (dy, dx) == (0, 0):
        masked = x                        # centre tap: always in-bounds
      else:
        shift = (-(dy * W + dx)) % HW
        shifted = pltpu.roll(x, shift, axis=1)            # XLU lane rotate
        masked = shifted * masks_ref[t].astype(x.dtype)   # zero wrapped lanes
      stack_ref[pl.ds(t * NBC, NBC), :] = masked
      if (dy, dx) in _POOL_OFFSETS:
        # additive mask: 0 on valid lanes, -1e30 on out-of-image lanes
        mp = jnp.maximum(mp, masked.astype(jnp.float32) + masks_ref[25 + k])
        k += 1
    # Single MXU contraction over K = 25 * NB * C (no per-tap pushes).
    acc = jnp.dot(w_ref[...], stack_ref[...],
                  preferred_element_type=jnp.float32)     # (NBC, HW) f32
    out_ref[...] = (acc + alpha_ref[0] * mp).astype(out_ref.dtype)

  return kernel


def _fold_linear_ops(w3, w5, weights):
  """Folds skip/conv3x3/conv5x5/avg_pool into per-tap (25, C_out, C_in) weights."""
  C = w3.shape[-1]
  eye = jnp.eye(C, dtype=jnp.float32)
  w_eff = weights[3] * w5.astype(jnp.float32)                            # conv_5x5
  w_eff = w_eff.at[1:4, 1:4].add(weights[2] * w3.astype(jnp.float32))    # conv_3x3
  w_eff = w_eff.at[2, 2].add(weights[1] * eye)                           # skip_connect
  w_eff = w_eff.at[1:4, 1:4].add((weights[5] / 9.0) * eye)               # avg_pool_3x3
  # weights[0] ("none") contributes zero; weights[4] (max-pool) stays separate.
  return jnp.transpose(w_eff, (0, 1, 3, 2)).reshape(25, C, C)            # (t, Co, Ci)


def _expand_weight_slab(w_taps, NB):
  """(25, Co, Ci) -> (NB*Co, 25*NB*Ci), block-diagonal over the NB tile images."""
  _, Co, Ci = w_taps.shape
  w_big = jnp.einsum("nm,toi->notmi", jnp.eye(NB, dtype=w_taps.dtype), w_taps)
  return w_big.reshape(NB * Co, 25 * NB * Ci)


@jax.jit
def _mixed_op_forward(x_nchw, weights, w3, w5):
  N, C, H, W = x_nchw.shape
  HW = H * W

  n_cores = _tensorcores_per_device()
  NB = _pick_nb(N, C, n_cores)
  NBC = NB * C
  grid = (N // NB,)

  # bf16 MXU operands only pay off at production channel counts (C >= 32);
  # masks / max-pool path / accumulator stay f32 on every generation.
  compute_dtype = jnp.bfloat16 if C >= 32 else jnp.float32

  # Free reshape only: NCHW is contiguous, so (N,C,H,W) -> (N/NB, NB*C, H*W).
  x_tiles = x_nchw.reshape(N // NB, NBC, HW).astype(compute_dtype)

  weights_f32 = weights.astype(jnp.float32)
  w_slab = _expand_weight_slab(_fold_linear_ops(w3, w5, weights_f32), NB)
  w_slab = w_slab.astype(compute_dtype)
  alpha_pool = weights_f32[4:5]                           # (1,) SMEM scalar

  masks = _build_masks(H, W, NBC)                         # (33, NBC, HW) constant

  kernel = _make_mixed_op_kernel(H, W, C, NB)

  cost = pl.CostEstimate(
      flops=2 * N * C * 25 * NBC * HW + 2 * N * C * HW * (25 + 16),
      transcendentals=0,
      bytes_accessed=(4 * 2 * N * C * HW) + 4 * 33 * NBC * HW + 4 * NBC * 25 * NBC,
  )

  out_tiles = pl.pallas_call(
      kernel,
      out_shape=jax.ShapeDtypeStruct((N // NB, NBC, HW), jnp.float32),
      grid_spec=pltpu.PrefetchScalarGridSpec(
          num_scalar_prefetch=0,
          grid=grid,
          in_specs=[
              pl.BlockSpec(memory_space=pltpu.MemorySpace.SMEM),       # alpha_pool
              pl.BlockSpec(masks.shape, lambda b: (0, 0, 0)),          # fused masks
              pl.BlockSpec((None, NBC, HW), lambda b: (b, 0, 0)),      # x tile
              pl.BlockSpec((NBC, 25 * NBC), lambda b: (0, 0)),         # weight slab
          ],
          out_specs=pl.BlockSpec((None, NBC, HW), lambda b: (b, 0, 0)),
          scratch_shapes=[pltpu.VMEM((25 * NBC, HW), compute_dtype)],
      ),
      compiler_params=pltpu.CompilerParams(
          dimension_semantics=("parallel",),
          vmem_limit_bytes=32 * 1024 * 1024,
      ),
      cost_estimate=cost,
  )(alpha_pool, masks, x_tiles, w_slab)

  return out_tiles.reshape(N, C, H, W)                    # free reshape


class MixedOpPallas:
  """JAX/Pallas re-implementation of MixedOp.forward(x, weights)."""

  def __init__(self, C, stride, emb_dim, dropout, key):
    assert stride == 1, "TODO(synk): stride>1 (FactorizedReduce path) not implemented"
    self.C = C
    self.stride = stride
    self.emb_dim = emb_dim      # unused by the implemented primitives
    self.dropout = dropout      # inference mode: dropout is a no-op
    k3, k5 = jax.random.split(key)
    # conv weights, HWIO layout, deterministic init
    self.w3 = (0.1 * jax.random.normal(k3, (3, 3, C, C))).astype(jnp.float32)
    self.w5 = (0.1 * jax.random.normal(k5, (5, 5, C, C))).astype(jnp.float32)

  def __call__(self, x_nchw, weights):
    # x_nchw: (N, C, H, W) f32, weights: (len(PRIMITIVES),) f32
    assert x_nchw.shape[1] == self.C
    return _mixed_op_forward(x_nchw, weights, self.w3, self.w5)


def _reference(x_nchw, weights, w3, w5):
  """Pure-JAX reference for correctness checking."""
  x = jnp.transpose(x_nchw, (0, 2, 3, 1)).astype(jnp.float32)            # NHWC
  dn = ("NHWC", "HWIO", "NHWC")
  c3 = lax.conv_general_dilated(x, w3, (1, 1), "SAME", dimension_numbers=dn)
  c5 = lax.conv_general_dilated(x, w5, (1, 1), "SAME", dimension_numbers=dn)
  mp = lax.reduce_window(x, -jnp.inf, lax.max, (1, 3, 3, 1), (1, 1, 1, 1),
                         [(0, 0), (1, 1), (1, 1), (0, 0)])
  ap = lax.reduce_window(x, 0.0, lax.add, (1, 3, 3, 1), (1, 1, 1, 1),
                         [(0, 0), (1, 1), (1, 1), (0, 0)]) / 9.0
  out = (weights[0] * jnp.zeros_like(x) + weights[1] * x +
         weights[2] * c3 + weights[3] * c5 +
         weights[4] * mp + weights[5] * ap)
  return jnp.transpose(out, (0, 3, 1, 2))                                # NCHW


if __name__ == "__main__":
  key = jax.random.PRNGKey(0)
  kx, ka, kw = jax.random.split(key, 3)

  N, C, H, W = 2, 4, 16, 16
  emb_dim, dropout, stride = 32, 0.1, 1

  x = jax.random.normal(kx, (N, C, H, W), dtype=jnp.float32)             # NCHW
  # Architecture weights (as produced by softmax over alphas in the search)
  weights = jax.nn.softmax(jax.random.normal(ka, (len(PRIMITIVES),)))

  mixed_op = MixedOpPallas(C, stride, emb_dim, dropout, kw)
  out = jax.block_until_ready(mixed_op(x, weights))

  ref = _reference(x, weights, mixed_op.w3, mixed_op.w5)
  assert out.shape == (N, C, H, W)
  assert jnp.allclose(out, ref, atol=2e-4, rtol=2e-4), "mismatch vs reference"

  print("KERNEL_OK")
</pallas_src>

<mosaic_0001>
module attributes {stable_mosaic.version = 11 : i64} {
  func.func @kernel(%arg0: i32, %arg1: memref<1xf32, #tpu.memory_space<smem>>, %arg2: memref<33x8x256xf32, #tpu.memory_space<vmem>>, %arg3: memref<1x8x256xf32, #tpu.memory_space<vmem>>, %arg4: memref<8x200xf32, #tpu.memory_space<vmem>>, %arg5: memref<1x8x256xf32, #tpu.memory_space<vmem>>, %arg6: memref<200x256xf32, #tpu.memory_space<vmem>>) attributes {dimension_semantics = [#tpu.dimension_semantics<parallel>], iteration_bounds = array<i64: 1>, scalar_prefetch = 0 : i64, scratch_operands = 1 : i64, tpu.core_type = #tpu.core_type<tc>, window_params = [{transform_indices = @transform_0, window_bounds = array<i64: 1>}, {pipeline_mode = #tpu.pipeline_mode<synchronous>, transform_indices = @transform_1, window_bounds = array<i64: 33, 8, 256>}, {transform_indices = @transform_2, window_bounds = array<i64: 1, 8, 256>}, {pipeline_mode = #tpu.pipeline_mode<synchronous>, transform_indices = @transform_3, window_bounds = array<i64: 8, 200>}, {transform_indices = @transform_4, window_bounds = array<i64: 1, 8, 256>}]} {
    %c0 = arith.constant 0 : index
    %c0_0 = arith.constant 0 : index
    %c0_1 = arith.constant 0 : index
    %0 = vector.load %arg3[%c0, %c0_0, %c0_1] : memref<1x8x256xf32, #tpu.memory_space<vmem>>, vector<1x8x256xf32>
    %1 = vector.shape_cast %0 : vector<1x8x256xf32> to vector<8x256xf32>
    %c34_i32 = arith.constant 34 : i32
    %2 = tpu.dynamic_rotate %1 by %c34_i32 dim 1 : vector<8x256xf32>, i32 -> vector<8x256xf32>
    %c0_2 = arith.constant 0 : index
    %c0_3 = arith.constant 0 : index
    %c0_4 = arith.constant 0 : index
    %3 = vector.load %arg2[%c0_2, %c0_3, %c0_4] : memref<33x8x256xf32, #tpu.memory_space<vmem>>, vector<1x8x256xf32>
    %4 = vector.shape_cast %3 : vector<1x8x256xf32> to vector<8x256xf32>
    %5 = arith.mulf %2, %4 : vector<8x256xf32>
    %c0_5 = arith.constant 0 : index
    %c0_6 = arith.constant 0 : index
    %6 = vector.load %arg6[%c0_5, %c0_6] : memref<200x256xf32, #tpu.memory_space<vmem>>, vector<8x256xf32>
    tpu.vector_store %arg6[%c0_5, %c0_6], %5 {strides = array<i32>} : memref<200x256xf32, #tpu.memory_space<vmem>>, vector<8x256xf32>,
    %c33_i32 = arith.constant 33 : i32
    %7 = tpu.dynamic_rotate %1 by %c33_i32 dim 1 : vector<8x256xf32>, i32 -> vector<8x256xf32>
    %c1 = arith.constant 1 : index
    %c0_7 = arith.constant 0 : index
    %c0_8 = arith.constant 0 : index
    %8 = vector.load %arg2[%c1, %c0_7, %c0_8] : memref<33x8x256xf32, #tpu.memory_space<vmem>>, vector<1x8x256xf32>
    %9 = vector.shape_cast %8 : vector<1x8x256xf32> to vector<8x256xf32>
    %10 = arith.mulf %7, %9 : vector<8x256xf32>
    %c8 = arith.constant 8 : index
    %c0_9 = arith.constant 0 : index
    %11 = vector.load %arg6[%c8, %c0_9] : memref<200x256xf32, #tpu.memory_space<vmem>>, vector<8x256xf32>
    tpu.vector_store %arg6[%c8, %c0_9], %10 {strides = array<i32>} : memref<200x256xf32, #tpu.memory_space<vmem>>, vector<8x256xf32>,
    %c32_i32 = arith.constant 32 : i32
    %12 = tpu.dynamic_rotate %1 by %c32_i32 dim 1 : vector<8x256xf32>, i32 -> vector<8x256xf32>
    %c2 = arith.constant 2 : index
    %c0_10 = arith.constant 0 : index
    %c0_11 = arith.constant 0 : index
    %13 = vector.load %arg2[%c2, %c0_10, %c0_11] : memref<33x8x256xf32, #tpu.memory_space<vmem>>, vector<1x8x256xf32>
    %14 = vector.shape_cast %13 : vector<1x8x256xf32> to vector<8x256xf32>
    %15 = arith.mulf %12, %14 : vector<8x256xf32>
    %c16 = arith.constant 16 : index
    %c0_12 = arith.constant 0 : index
    %16 = vector.load %arg6[%c16, %c0_12] : memref<200x256xf32, #tpu.memory_space<vmem>>, vector<8x256xf32>
    tpu.vector_store %arg6[%c16, %c0_12], %15 {strides = array<i32>} : memref<200x256xf32, #tpu.memory_space<vmem>>, vector<8x256xf32>,
    %c31_i32 = arith.constant 31 : i32
    %17 = tpu.dynamic_rotate %1 by %c31_i32 dim 1 : vector<8x256xf32>, i32 -> vector<8x256xf32>
    %c3 = arith.constant 3 : index
    %c0_13 = arith.constant 0 : index
    %c0_14 = arith.constant 0 : index
    %18 = vector.load %arg2[%c3, %c0_13, %c0_14] : memref<33x8x256xf32, #tpu.memory_space<vmem>>, vector<1x8x256xf32>
    %19 = vector.shape_cast %18 : vector<1x8x256xf32> to vector<8x256xf32>
    %20 = arith.mulf %17, %19 : vector<8x256xf32>
    %c24 = arith.constant 24 : index
    %c0_15 = arith.constant 0 : index
    %21 = vector.load %arg6[%c24, %c0_15] : memref<200x256xf32, #tpu.memory_space<vmem>>, vector<8x256xf32>
    tpu.vector_store %arg6[%c24, %c0_15], %20 {strides = array<i32>} : memref<200x256xf32, #tpu.memory_space<vmem>>, vector<8x256xf32>,
    %c30_i32 = arith.constant 30 : i32
    %22 = tpu.dynamic_rotate %1 by %c30_i32 dim 1 : vector<8x256xf32>, i32 -> vector<8x256xf32>
    %c4 = arith.constant 4 : index
    %c0_16 = arith.constant 0 : index
    %c0_17 = arith.constant 0 : index
    %23 = vector.load %arg2[%c4, %c0_16, %c0_17] : memref<33x8x256xf32, #tpu.memory_space<vmem>>, vector<1x8x256xf32>
    %24 = vector.shape_cast %23 : vector<1x8x256xf32> to vector<8x256xf32>
    %25 = arith.mulf %22, %24 : vector<8x256xf32>
    %c32 = arith.constant 32 : index
    %c0_18 = arith.constant 0 : index
    %26 = vector.load %arg6[%c32, %c0_18] : memref<200x256xf32, #tpu.memory_space<vmem>>, vector<8x256xf32>
    tpu.vector_store %arg6[%c32, %c0_18], %25 {strides = array<i32>} : memref<200x256xf32, #tpu.memory_space<vmem>>, vector<8x256xf32>,
    %c18_i32 = arith.constant 18 : i32
    %27 = tpu.dynamic_rotate %1 by %c18_i32 dim 1 : vector<8x256xf32>, i32 -> vector<8x256xf32>
    %c5 = arith.constant 5 : index
    %c0_19 = arith.constant 0 : index
    %c0_20 = arith.constant 0 : index
    %28 = vector.load %arg2[%c5, %c0_19, %c0_20] : memref<33x8x256xf32, #tpu.memory_space<vmem>>, vector<1x8x256xf32>
    %29 = vector.shape_cast %28 : vector<1x8x256xf32> to vector<8x256xf32>
    %30 = arith.mulf %27, %29 : vector<8x256xf32>
    %c40 = arith.constant 40 : index
    %c0_21 = arith.constant 0 : index
    %31 = vector.load %arg6[%c40, %c0_21] : memref<200x256xf32, #tpu.memory_space<vmem>>, vector<8x256xf32>
    tpu.vector_store %arg6[%c40, %c0_21], %30 {strides = array<i32>} : memref<200x256xf32, #tpu.memory_space<vmem>>, vector<8x256xf32>,
    %c17_i32 = arith.constant 17 : i32
    %32 = tpu.dynamic_rotate %1 by %c17_i32 dim 1 : vector<8x256xf32>, i32 -> vector<8x256xf32>
    %c6 = arith.constant 6 : index
    %c0_22 = arith.constant 0 : index
    %c0_23 = arith.constant 0 : index
    %33 = vector.load %arg2[%c6, %c0_22, %c0_23] : memref<33x8x256xf32, #tpu.memory_space<vmem>>, vector<1x8x256xf32>
    %34 = vector.shape_cast %33 : vector<1x8x256xf32> to vector<8x256xf32>
    %35 = arith.mulf %32, %34 : vector<8x256xf32>
    %c48 = arith.constant 48 : index
    %c0_24 = arith.constant 0 : index
    %36 = vector.load %arg6[%c48, %c0_24] : memref<200x256xf32, #tpu.memory_space<vmem>>, vector<8x256xf32>
    tpu.vector_store %arg6[%c48, %c0_24], %35 {strides = array<i32>} : memref<200x256xf32, #tpu.memory_space<vmem>>, vector<8x256xf32>,
    %c25 = arith.constant 25 : index
    %c0_25 = arith.constant 0 : index
    %c0_26 = arith.constant 0 : index
    %37 = vector.load %arg2[%c25, %c0_25, %c0_26] : memref<33x8x256xf32, #tpu.memory_space<vmem>>, vector<1x8x256xf32>
    %38 = vector.shape_cast %37 : vector<1x8x256xf32> to vector<8x256xf32>
    %39 = arith.addf %35, %38 : vector<8x256xf32>
    %40 = arith.maximumf %1, %39 : vector<8x256xf32>
    %c16_i32 = arith.constant 16 : i32
    %41 = tpu.dynamic_rotate %1 by %c16_i32 dim 1 : vector<8x256xf32>, i32 -> vector<8x256xf32>
    %c7 = arith.constant 7 : index
    %c0_27 = arith.constant 0 : index
    %c0_28 = arith.constant 0 : index
    %42 = vector.load %arg2[%c7, %c0_27, %c0_28] : memref<33x8x256xf32, #tpu.memory_space<vmem>>, vector<1x8x256xf32>
    %43 = vector.shape_cast %42 : vector<1x8x256xf32> to vector<8x256xf32>
    %44 = arith.mulf %41, %43 : vector<8x256xf32>
    %c56 = arith.constant 56 : index
    %c0_29 = arith.constant 0 : index
    %45 = vector.load %arg6[%c56, %c0_29] : memref<200x256xf32, #tpu.memory_space<vmem>>, vector<8x256xf32>
    tpu.vector_store %arg6[%c56, %c0_29], %44 {strides = array<i32>} : memref<200x256xf32, #tpu.memory_space<vmem>>, vector<8x256xf32>,
    %c26 = arith.constant 26 : index
    %c0_30 = arith.constant 0 : index
    %c0_31 = arith.constant 0 : index
    %46 = vector.load %arg2[%c26, %c0_30, %c0_31] : memref<33x8x256xf32, #tpu.memory_space<vmem>>, vector<1x8x256xf32>
    %47 = vector.shape_cast %46 : vector<1x8x256xf32> to vector<8x256xf32>
    %48 = arith.addf %44, %47 : vector<8x256xf32>
    %49 = arith.maximumf %40, %48 : vector<8x256xf32>
    %c15_i32 = arith.constant 15 : i32
    %50 = tpu.dynamic_rotate %1 by %c15_i32 dim 1 : vector<8x256xf32>, i32 -> vector<8x256xf32>
    %c8_32 = arith.constant 8 : index
    %c0_33 = arith.constant 0 : index
    %c0_34 = arith.constant 0 : index
    %51 = vector.load %arg2[%c8_32, %c0_33, %c0_34] : memref<33x8x256xf32, #tpu.memory_space<vmem>>, vector<1x8x256xf32>
    %52 = vector.shape_cast %51 : vector<1x8x256xf32> to vector<8x256xf32>
    %53 = arith.mulf %50, %52 : vector<8x256xf32>
    %c64 = arith.constant 64 : index
    %c0_35 = arith.constant 0 : index
    %54 = vector.load %arg6[%c64, %c0_35] : memref<200x256xf32, #tpu.memory_space<vmem>>, vector<8x256xf32>
    tpu.vector_store %arg6[%c64, %c0_35], %53 {strides = array<i32>} : memref<200x256xf32, #tpu.memory_space<vmem>>, vector<8x256xf32>,
    %c27 = arith.constant 27 : index
    %c0_36 = arith.constant 0 : index
    %c0_37 = arith.constant 0 : index
    %55 = vector.load %arg2[%c27, %c0_36, %c0_37] : memref<33x8x256xf32, #tpu.memory_space<vmem>>, vector<1x8x256xf32>
    %56 = vector.shape_cast %55 : vector<1x8x256xf32> to vector<8x256xf32>
    %57 = arith.addf %53, %56 : vector<8x256xf32>
    %58 = arith.maximumf %49, %57 : vector<8x256xf32>
    %c14_i32 = arith.constant 14 : i32
    %59 = tpu.dynamic_rotate %1 by %c14_i32 dim 1 : vector<8x256xf32>, i32 -> vector<8x256xf32>
    %c9 = arith.constant 9 : index
    %c0_38 = arith.constant 0 : index
    %c0_39 = arith.constant 0 : index
    %60 = vector.load %arg2[%c9, %c0_38, %c0_39] : memref<33x8x256xf32, #tpu.memory_space<vmem>>, vector<1x8x256xf32>
    %61 = vector.shape_cast %60 : vector<1x8x256xf32> to vector<8x256xf32>
    %62 = arith.mulf %59, %61 : vector<8x256xf32>
    %c72 = arith.constant 72 : index
    %c0_40 = arith.constant 0 : index
    %63 = vector.load %arg6[%c72, %c0_40] : memref<200x256xf32, #tpu.memory_space<vmem>>, vector<8x256xf32>
    tpu.vector_store %arg6[%c72, %c0_40], %62 {strides = array<i32>} : memref<200x256xf32, #tpu.memory_space<vmem>>, vector<8x256xf32>,
    %c2_i32 = arith.constant 2 : i32
    %64 = tpu.dynamic_rotate %1 by %c2_i32 dim 1 : vector<8x256xf32>, i32 -> vector<8x256xf32>
    %c10 = arith.constant 10 : index
    %c0_41 = arith.constant 0 : index
    %c0_42 = arith.constant 0 : index
    %65 = vector.load %arg2[%c10, %c0_41, %c0_42] : memref<33x8x256xf32, #tpu.memory_space<vmem>>, vector<1x8x256xf32>
    %66 = vector.shape_cast %65 : vector<1x8x256xf32> to vector<8x256xf32>
    %67 = arith.mulf %64, %66 : vector<8x256xf32>
    %c80 = arith.constant 80 : index
    %c0_43 = arith.constant 0 : index
    %68 = vector.load %arg6[%c80, %c0_43] : memref<200x256xf32, #tpu.memory_space<vmem>>, vector<8x256xf32>
    tpu.vector_store %arg6[%c80, %c0_43], %67 {strides = array<i32>} : memref<200x256xf32, #tpu.memory_space<vmem>>, vector<8x256xf32>,
    %c1_i32 = arith.constant 1 : i32
    %69 = tpu.dynamic_rotate %1 by %c1_i32 dim 1 : vector<8x256xf32>, i32 -> vector<8x256xf32>
    %c11 = arith.constant 11 : index
    %c0_44 = arith.constant 0 : index
    %c0_45 = arith.constant 0 : index
    %70 = vector.load %arg2[%c11, %c0_44, %c0_45] : memref<33x8x256xf32, #tpu.memory_space<vmem>>, vector<1x8x256xf32>
    %71 = vector.shape_cast %70 : vector<1x8x256xf32> to vector<8x256xf32>
    %72 = arith.mulf %69, %71 : vector<8x256xf32>
    %c88 = arith.constant 88 : index
    %c0_46 = arith.constant 0 : index
    %73 = vector.load %arg6[%c88, %c0_46] : memref<200x256xf32, #tpu.memory_space<vmem>>, vector<8x256xf32>
    tpu.vector_store %arg6[%c88, %c0_46], %72 {strides = array<i32>} : memref<200x256xf32, #tpu.memory_space<vmem>>, vector<8x256xf32>,
    %c28 = arith.constant 28 : index
    %c0_47 = arith.constant 0 : index
    %c0_48 = arith.constant 0 : index
    %74 = vector.load %arg2[%c28, %c0_47, %c0_48] : memref<33x8x256xf32, #tpu.memory_space<vmem>>, vector<1x8x256xf32>
    %75 = vector.shape_cast %74 : vector<1x8x256xf32> to vector<8x256xf32>
    %76 = arith.addf %72, %75 : vector<8x256xf32>
    %77 = arith.maximumf %58, %76 : vector<8x256xf32>
    %c96 = arith.constant 96 : index
    %c0_49 = arith.constant 0 : index
    %78 = vector.load %arg6[%c96, %c0_49] : memref<200x256xf32, #tpu.memory_space<vmem>>, vector<8x256xf32>
    tpu.vector_store %arg6[%c96, %c0_49], %1 {strides = array<i32>} : memref<200x256xf32, #tpu.memory_space<vmem>>, vector<8x256xf32>,
    %c255_i32 = arith.constant 255 : i32
    %79 = tpu.dynamic_rotate %1 by %c255_i32 dim 1 : vector<8x256xf32>, i32 -> vector<8x256xf32>
    %c13 = arith.constant 13 : index
    %c0_50 = arith.constant 0 : index
    %c0_51 = arith.constant 0 : index
    %80 = vector.load %arg2[%c13, %c0_50, %c0_51] : memref<33x8x256xf32, #tpu.memory_space<vmem>>, vector<1x8x256xf32>
    %81 = vector.shape_cast %80 : vector<1x8x256xf32> to vector<8x256xf32>
    %82 = arith.mulf %79, %81 : vector<8x256xf32>
    %c104 = arith.constant 104 : index
    %c0_52 = arith.constant 0 : index
    %83 = vector.load %arg6[%c104, %c0_52] : memref<200x256xf32, #tpu.memory_space<vmem>>, vector<8x256xf32>
    tpu.vector_store %arg6[%c104, %c0_52], %82 {strides = array<i32>} : memref<200x256xf32, #tpu.memory_space<vmem>>, vector<8x256xf32>,
    %c29 = arith.constant 29 : index
    %c0_53 = arith.constant 0 : index
    %c0_54 = arith.constant 0 : index
    %84 = vector.load %arg2[%c29, %c0_53, %c0_54] : memref<33x8x256xf32, #tpu.memory_space<vmem>>, vector<1x8x256xf32>
    %85 = vector.shape_cast %84 : vector<1x8x256xf32> to vector<8x256xf32>
    %86 = arith.addf %82, %85 : vector<8x256xf32>
    %87 = arith.maximumf %77, %86 : vector<8x256xf32>
    %c254_i32 = arith.constant 254 : i32
    %88 = tpu.dynamic_rotate %1 by %c254_i32 dim 1 : vector<8x256xf32>, i32 -> vector<8x256xf32>
    %c14 = arith.constant 14 : index
    %c0_55 = arith.constant 0 : index
    %c0_56 = arith.constant 0 : index
    %89 = vector.load %arg2[%c14, %c0_55, %c0_56] : memref<33x8x256xf32, #tpu.memory_space<vmem>>, vector<1x8x256xf32>
    %90 = vector.shape_cast %89 : vector<1x8x256xf32> to vector<8x256xf32>
    %91 = arith.mulf %88, %90 : vector<8x256xf32>
    %c112 = arith.constant 112 : index
    %c0_57 = arith.constant 0 : index
    %92 = vector.load %arg6[%c112, %c0_57] : memref<200x256xf32, #tpu.memory_space<vmem>>, vector<8x256xf32>
    tpu.vector_store %arg6[%c112, %c0_57], %91 {strides = array<i32>} : memref<200x256xf32, #tpu.memory_space<vmem>>, vector<8x256xf32>,
    %c242_i32 = arith.constant 242 : i32
    %93 = tpu.dynamic_rotate %1 by %c242_i32 dim 1 : vector<8x256xf32>, i32 -> vector<8x256xf32>
    %c15 = arith.constant 15 : index
    %c0_58 = arith.constant 0 : index
    %c0_59 = arith.constant 0 : index
    %94 = vector.load %arg2[%c15, %c0_58, %c0_59] : memref<33x8x256xf32, #tpu.memory_space<vmem>>, vector<1x8x256xf32>
    %95 = vector.shape_cast %94 : vector<1x8x256xf32> to vector<8x256xf32>
    %96 = arith.mulf %93, %95 : vector<8x256xf32>
    %c120 = arith.constant 120 : index
    %c0_60 = arith.constant 0 : index
    %97 = vector.load %arg6[%c120, %c0_60] : memref<200x256xf32, #tpu.memory_space<vmem>>, vector<8x256xf32>
    tpu.vector_store %arg6[%c120, %c0_60], %96 {strides = array<i32>} : memref<200x256xf32, #tpu.memory_space<vmem>>, vector<8x256xf32>,
    %c241_i32 = arith.constant 241 : i32
    %98 = tpu.dynamic_rotate %1 by %c241_i32 dim 1 : vector<8x256xf32>, i32 -> vector<8x256xf32>
    %c16_61 = arith.constant 16 : index
    %c0_62 = arith.constant 0 : index
    %c0_63 = arith.constant 0 : index
    %99 = vector.load %arg2[%c16_61, %c0_62, %c0_63] : memref<33x8x256xf32, #tpu.memory_space<vmem>>, vector<1x8x256xf32>
    %100 = vector.shape_cast %99 : vector<1x8x256xf32> to vector<8x256xf32>
    %101 = arith.mulf %98, %100 : vector<8x256xf32>
    %c128 = arith.constant 128 : index
    %c0_64 = arith.constant 0 : index
    %102 = vector.load %arg6[%c128, %c0_64] : memref<200x256xf32, #tpu.memory_space<vmem>>, vector<8x256xf32>
    tpu.vector_store %arg6[%c128, %c0_64], %101 {strides = array<i32>} : memref<200x256xf32, #tpu.memory_space<vmem>>, vector<8x256xf32>,
    %c30 = arith.constant 30 : index
    %c0_65 = arith.constant 0 : index
    %c0_66 = arith.constant 0 : index
    %103 = vector.load %arg2[%c30, %c0_65, %c0_66] : memref<33x8x256xf32, #tpu.memory_space<vmem>>, vector<1x8x256xf32>
    %104 = vector.shape_cast %103 : vector<1x8x256xf32> to vector<8x256xf32>
    %105 = arith.addf %101, %104 : vector<8x256xf32>
    %106 = arith.maximumf %87, %105 : vector<8x256xf32>
    %c240_i32 = arith.constant 240 : i32
    %107 = tpu.dynamic_rotate %1 by %c240_i32 dim 1 : vector<8x256xf32>, i32 -> vector<8x256xf32>
    %c17 = arith.constant 17 : index
    %c0_67 = arith.constant 0 : index
    %c0_68 = arith.constant 0 : index
    %108 = vector.load %arg2[%c17, %c0_67, %c0_68] : memref<33x8x256xf32, #tpu.memory_space<vmem>>, vector<1x8x256xf32>
    %109 = vector.shape_cast %108 : vector<1x8x256xf32> to vector<8x256xf32>
    %110 = arith.mulf %107, %109 : vector<8x256xf32>
    %c136 = arith.constant 136 : index
    %c0_69 = arith.constant 0 : index
    %111 = vector.load %arg6[%c136, %c0_69] : memref<200x256xf32, #tpu.memory_space<vmem>>, vector<8x256xf32>
    tpu.vector_store %arg6[%c136, %c0_69], %110 {strides = array<i32>} : memref<200x256xf32, #tpu.memory_space<vmem>>, vector<8x256xf32>,
    %c31 = arith.constant 31 : index
    %c0_70 = arith.constant 0 : index
    %c0_71 = arith.constant 0 : index
    %112 = vector.load %arg2[%c31, %c0_70, %c0_71] : memref<33x8x256xf32, #tpu.memory_space<vmem>>, vector<1x8x256xf32>
    %113 = vector.shape_cast %112 : vector<1x8x256xf32> to vector<8x256xf32>
    %114 = arith.addf %110, %113 : vector<8x256xf32>
    %115 = arith.maximumf %106, %114 : vector<8x256xf32>
    %c239_i32 = arith.constant 239 : i32
    %116 = tpu.dynamic_rotate %1 by %c239_i32 dim 1 : vector<8x256xf32>, i32 -> vector<8x256xf32>
    %c18 = arith.constant 18 : index
    %c0_72 = arith.constant 0 : index
    %c0_73 = arith.constant 0 : index
    %117 = vector.load %arg2[%c18, %c0_72, %c0_73] : memref<33x8x256xf32, #tpu.memory_space<vmem>>, vector<1x8x256xf32>
    %118 = vector.shape_cast %117 : vector<1x8x256xf32> to vector<8x256xf32>
    %119 = arith.mulf %116, %118 : vector<8x256xf32>
    %c144 = arith.constant 144 : index
    %c0_74 = arith.constant 0 : index
    %120 = vector.load %arg6[%c144, %c0_74] : memref<200x256xf32, #tpu.memory_space<vmem>>, vector<8x256xf32>
    tpu.vector_store %arg6[%c144, %c0_74], %119 {strides = array<i32>} : memref<200x256xf32, #tpu.memory_space<vmem>>, vector<8x256xf32>,
    %c32_75 = arith.constant 32 : index
    %c0_76 = arith.constant 0 : index
    %c0_77 = arith.constant 0 : index
    %121 = vector.load %arg2[%c32_75, %c0_76, %c0_77] : memref<33x8x256xf32, #tpu.memory_space<vmem>>, vector<1x8x256xf32>
    %122 = vector.shape_cast %121 : vector<1x8x256xf32> to vector<8x256xf32>
    %123 = arith.addf %119, %122 : vector<8x256xf32>
    %124 = arith.maximumf %115, %123 : vector<8x256xf32>
    %c238_i32 = arith.constant 238 : i32
    %125 = tpu.dynamic_rotate %1 by %c238_i32 dim 1 : vector<8x256xf32>, i32 -> vector<8x256xf32>
    %c19 = arith.constant 19 : index
    %c0_78 = arith.constant 0 : index
    %c0_79 = arith.constant 0 : index
    %126 = vector.load %arg2[%c19, %c0_78, %c0_79] : memref<33x8x256xf32, #tpu.memory_space<vmem>>, vector<1x8x256xf32>
    %127 = vector.shape_cast %126 : vector<1x8x256xf32> to vector<8x256xf32>
    %128 = arith.mulf %125, %127 : vector<8x256xf32>
    %c152 = arith.constant 152 : index
    %c0_80 = arith.constant 0 : index
    %129 = vector.load %arg6[%c152, %c0_80] : memref<200x256xf32, #tpu.memory_space<vmem>>, vector<8x256xf32>
    tpu.vector_store %arg6[%c152, %c0_80], %128 {strides = array<i32>} : memref<200x256xf32, #tpu.memory_space<vmem>>, vector<8x256xf32>,
    %c226_i32 = arith.constant 226 : i32
    %130 = tpu.dynamic_rotate %1 by %c226_i32 dim 1 : vector<8x256xf32>, i32 -> vector<8x256xf32>
    %c20 = arith.constant 20 : index
    %c0_81 = arith.constant 0 : index
    %c0_82 = arith.constant 0 : index
    %131 = vector.load %arg2[%c20, %c0_81, %c0_82] : memref<33x8x256xf32, #tpu.memory_space<vmem>>, vector<1x8x256xf32>
    %132 = vector.shape_cast %131 : vector<1x8x256xf32> to vector<8x256xf32>
    %133 = arith.mulf %130, %132 : vector<8x256xf32>
    %c160 = arith.constant 160 : index
    %c0_83 = arith.constant 0 : index
    %134 = vector.load %arg6[%c160, %c0_83] : memref<200x256xf32, #tpu.memory_space<vmem>>, vector<8x256xf32>
    tpu.vector_store %arg6[%c160, %c0_83], %133 {strides = array<i32>} : memref<200x256xf32, #tpu.memory_space<vmem>>, vector<8x256xf32>,
    %c225_i32 = arith.constant 225 : i32
    %135 = tpu.dynamic_rotate %1 by %c225_i32 dim 1 : vector<8x256xf32>, i32 -> vector<8x256xf32>
    %c21 = arith.constant 21 : index
    %c0_84 = arith.constant 0 : index
    %c0_85 = arith.constant 0 : index
    %136 = vector.load %arg2[%c21, %c0_84, %c0_85] : memref<33x8x256xf32, #tpu.memory_space<vmem>>, vector<1x8x256xf32>
    %137 = vector.shape_cast %136 : vector<1x8x256xf32> to vector<8x256xf32>
    %138 = arith.mulf %135, %137 : vector<8x256xf32>
    %c168 = arith.constant 168 : index
    %c0_86 = arith.constant 0 : index
    %139 = vector.load %arg6[%c168, %c0_86] : memref<200x256xf32, #tpu.memory_space<vmem>>, vector<8x256xf32>
    tpu.vector_store %arg6[%c168, %c0_86], %138 {strides = array<i32>} : memref<200x256xf32, #tpu.memory_space<vmem>>, vector<8x256xf32>,
    %c224_i32 = arith.constant 224 : i32
    %140 = tpu.dynamic_rotate %1 by %c224_i32 dim 1 : vector<8x256xf32>, i32 -> vector<8x256xf32>
    %c22 = arith.constant 22 : index
    %c0_87 = arith.constant 0 : index
    %c0_88 = arith.constant 0 : index
    %141 = vector.load %arg2[%c22, %c0_87, %c0_88] : memref<33x8x256xf32, #tpu.memory_space<vmem>>, vector<1x8x256xf32>
    %142 = vector.shape_cast %141 : vector<1x8x256xf32> to vector<8x256xf32>
    %143 = arith.mulf %140, %142 : vector<8x256xf32>
    %c176 = arith.constant 176 : index
    %c0_89 = arith.constant 0 : index
    %144 = vector.load %arg6[%c176, %c0_89] : memref<200x256xf32, #tpu.memory_space<vmem>>, vector<8x256xf32>
    tpu.vector_store %arg6[%c176, %c0_89], %143 {strides = array<i32>} : memref<200x256xf32, #tpu.memory_space<vmem>>, vector<8x256xf32>,
    %c223_i32 = arith.constant 223 : i32
    %145 = tpu.dynamic_rotate %1 by %c223_i32 dim 1 : vector<8x256xf32>, i32 -> vector<8x256xf32>
    %c23 = arith.constant 23 : index
    %c0_90 = arith.constant 0 : index
    %c0_91 = arith.constant 0 : index
    %146 = vector.load %arg2[%c23, %c0_90, %c0_91] : memref<33x8x256xf32, #tpu.memory_space<vmem>>, vector<1x8x256xf32>
    %147 = vector.shape_cast %146 : vector<1x8x256xf32> to vector<8x256xf32>
    %148 = arith.mulf %145, %147 : vector<8x256xf32>
    %c184 = arith.constant 184 : index
    %c0_92 = arith.constant 0 : index
    %149 = vector.load %arg6[%c184, %c0_92] : memref<200x256xf32, #tpu.memory_space<vmem>>, vector<8x256xf32>
    tpu.vector_store %arg6[%c184, %c0_92], %148 {strides = array<i32>} : memref<200x256xf32, #tpu.memory_space<vmem>>, vector<8x256xf32>,
    %c222_i32 = arith.constant 222 : i32
    %150 = tpu.dynamic_rotate %1 by %c222_i32 dim 1 : vector<8x256xf32>, i32 -> vector<8x256xf32>
    %c24_93 = arith.constant 24 : index
    %c0_94 = arith.constant 0 : index
    %c0_95 = arith.constant 0 : index
    %151 = vector.load %arg2[%c24_93, %c0_94, %c0_95] : memref<33x8x256xf32, #tpu.memory_space<vmem>>, vector<1x8x256xf32>
    %152 = vector.shape_cast %151 : vector<1x8x256xf32> to vector<8x256xf32>
    %153 = arith.mulf %150, %152 : vector<8x256xf32>
    %c192 = arith.constant 192 : index
    %c0_96 = arith.constant 0 : index
    %154 = vector.load %arg6[%c192, %c0_96] : memref<200x256xf32, #tpu.memory_space<vmem>>, vector<8x256xf32>
    tpu.vector_store %arg6[%c192, %c0_96], %153 {strides = array<i32>} : memref<200x256xf32, #tpu.memory_space<vmem>>, vector<8x256xf32>,
    %c0_97 = arith.constant 0 : index
    %c0_98 = arith.constant 0 : index
    %155 = vector.load %arg4[%c0_97, %c0_98] : memref<8x200xf32, #tpu.memory_space<vmem>>, vector<8x200xf32>
    %c0_99 = arith.constant 0 : index
    %c0_100 = arith.constant 0 : index
    %156 = vector.load %arg6[%c0_99, %c0_100] : memref<200x256xf32, #tpu.memory_space<vmem>>, vector<200x256xf32>
    %cst = arith.constant dense<0.000000e+00> : vector<8x256xf32>
    %157 = tpu.matmul %155, %156, %cst {dimension_numbers = #tpu.dot_dimension_numbers<[1], [0], [0], [1], [0, 0, 1, 1], [], []>} : vector<8x200xf32>, vector<200x256xf32>, vector<8x256xf32> -> vector<8x256xf32>
    %c0_101 = arith.constant 0 : index
    %158 = memref.load %arg1[%c0_101] : memref<1xf32, #tpu.memory_space<smem>>
    %159 = vector.broadcast %158 : f32 to vector<8x256xf32>
    %160 = arith.mulf %159, %124 : vector<8x256xf32>
    %161 = arith.addf %157, %160 : vector<8x256xf32>
    %c0_102 = arith.constant 0 : index
    %c0_103 = arith.constant 0 : index
    %c0_104 = arith.constant 0 : index
    %162 = vector.load %arg5[%c0_102, %c0_103, %c0_104] : memref<1x8x256xf32, #tpu.memory_space<vmem>>, vector<1x8x256xf32>
    %163 = vector.shape_cast %162 : vector<1x8x256xf32> to vector<8x256xf32>
    %164 = vector.shape_cast %161 : vector<8x256xf32> to vector<1x8x256xf32>
    tpu.vector_store %arg5[%c0_102, %c0_103, %c0_104], %164 {strides = array<i32>} : memref<1x8x256xf32, #tpu.memory_space<vmem>>, vector<1x8x256xf32>,
    return
  }
  func.func @transform_0(%arg0: i32) -> i32 {
    %c0_i32 = arith.constant 0 : i32
    %c0_i32_0 = arith.constant 0 : i32
    return %c0_i32 : i32
  }
  func.func @transform_1(%arg0: i32) -> (i32, i32, i32) {
    %c0_i32 = arith.constant 0 : i32
    %c0_i32_0 = arith.constant 0 : i32
    %c0_i32_1 = arith.constant 0 : i32
    %c0_i32_2 = arith.constant 0 : i32
    return %c0_i32, %c0_i32_0, %c0_i32_1 : i32, i32, i32
  }
  func.func @transform_2(%arg0: i32) -> (i32, i32, i32) {
    %c0_i32 = arith.constant 0 : i32
    %c0_i32_0 = arith.constant 0 : i32
    %c0_i32_1 = arith.constant 0 : i32
    return %arg0, %c0_i32, %c0_i32_0 : i32, i32, i32
  }
  func.func @transform_3(%arg0: i32) -> (i32, i32) {
    %c0_i32 = arith.constant 0 : i32
    %c0_i32_0 = arith.constant 0 : i32
    %c0_i32_1 = arith.constant 0 : i32
    return %c0_i32, %c0_i32_0 : i32, i32
  }
  func.func @transform_4(%arg0: i32) -> (i32, i32, i32) {
    %c0_i32 = arith.constant 0 : i32
    %c0_i32_0 = arith.constant 0 : i32
    %c0_i32_1 = arith.constant 0 : i32
    return %arg0, %c0_i32, %c0_i32_0 : i32, i32, i32
  }
}

</mosaic_0001>

<llo_original>
// kernel: _mixed_op_forward.1
$region0: #{_mixed_op_forward.1}
  #allocation0 [shape = 'u32[]', space=smem, size = 0x4, offset = 0x4, fixed_abs, tag = 'smem constant byte address 0x4 - core index']
  #allocation1 [shape = 'u32[144,128]{1,0:T(1,128)}', space=vmem, size = 0x12000, scoped, tag = 'internal scratch']
  #allocation2 [shape = 'f32[200,256]{1,0:T(8,128)}', space=vmem, size = 0x32000, scoped, tag = 'scratch operand']
  #allocation3 [shape = 'f32[1]{0:T(128)S(6)}', space=smem, size = 0x200, scoped, tag = 'scoped memory for _mixed_op_forward.1']
  %s0 = inlined_call_operand.<no memory space> [shape: f32[1], index: 0, kind: input, shape index: {}]
  %s1 = inlined_call_operand.vmem [shape: f32[33,8,256], index: 1, kind: input, shape index: {}]
  %s2 = inlined_call_operand.vmem [shape: f32[1,8,256], index: 2, kind: input, shape index: {}]
  %s3 = inlined_call_operand.vmem [shape: f32[8,200], index: 3, kind: input, shape index: {}]
  %s4 = inlined_call_operand.vmem [shape: f32[1,8,256], index: 4, kind: output, shape index: {}]
  %s5 = sld [smem:[#allocation0]]
  $region26: #{_mixed_op_forward.1} parent=0
    _
  %s7 = ssub.s32 1, %s5
  %s8 = scalar_select 0, %s7, %s5
  %9 = sst [smem:[#allocation3]] %s0
  // Predicated region
  $region2: #{_mixed_op_forward.1} parent=0 // pred_check
    _
  $region3: #{_mixed_op_forward.1} parent=0 // pred_check_branch
    %11 = sbr.rel (0) target = $region5
  $region4: #{_mixed_op_forward.1} parent=0 // pred_region
    _
  $region5: #{_mixed_op_forward.1} parent=0 // pred_fallthru
    _
  // Predicated region
  $region6: #{_mixed_op_forward.1} parent=0 // pred_check
    _
  $region7: #{_mixed_op_forward.1} parent=0 // pred_check_branch
    %13 = sbr.rel (0) target = $region9
  $region8: #{_mixed_op_forward.1} parent=0 // pred_region
    _
  $region9: #{_mixed_op_forward.1} parent=0 // pred_fallthru
    _
  // Predicated region
  $region10: #{_mixed_op_forward.1} parent=0 // pred_check
    _
  $region11: #{_mixed_op_forward.1} parent=0 // pred_check_branch
    %15 = sbr.rel (0) target = $region13
  $region12: #{_mixed_op_forward.1} parent=0 // pred_region
    _
  $region13: #{_mixed_op_forward.1} parent=0 // pred_fallthru
    _
  // Predicated region
  $region14: #{_mixed_op_forward.1} parent=0 // pred_check
    _
  $region15: #{_mixed_op_forward.1} parent=0 // pred_check_branch
    %17 = sbr.rel (0) target = $region17
  $region16: #{_mixed_op_forward.1} parent=0 // pred_region
    _
  $region17: #{_mixed_op_forward.1} parent=0 // pred_fallthru
    _
  %v18 = vld [vmem:[%s2] sm:$0xff]
  %v19 = vld [vmem:[%s2 + $0x8] sm:$0xff]
  %20 = vrot.lane.b32.xlu0 %v18, 34
  %v21 = vpop.permute.xlu0 %20
  %22 = vrot.lane.b32.xlu0 %v19, 34
  %v23 = vpop.permute.xlu0 %22
  %v24 = vlaneseq
  %v25 = vand.u32 %v24, 127
  %vm26 = vcmp.lt.s32.totalorder %v25, 34
  %v27 = vsel %vm26, %v21, %v23
  %v28 = vsel %vm26, %v23, %v21
  %v29 = vld [vmem:[%s1] sm:$0xff]
  %v30 = vld [vmem:[%s1 + $0x8] sm:$0xff]
  %v31 = vmul.f32 %v28, %v29
  %v32 = vmul.f32 %v27, %v30
  %33 = vst [vmem:[#allocation2] sm:$0xff] %v31
  %34 = vst [vmem:[#allocation2 + $0x8] sm:$0xff] %v32
  %35 = vrot.lane.b32.xlu0 %v18, 33
  %v36 = vpop.permute.xlu0 %35
  %37 = vrot.lane.b32.xlu0 %v19, 33
  %v38 = vpop.permute.xlu0 %37
  %vm39 = vcmp.lt.s32.totalorder %v25, 33
  %v40 = vsel %vm39, %v36, %v38
  %v41 = vsel %vm39, %v38, %v36
  %s42 = scalar_lea.vmem %s1, 16
  %v43 = vld [vmem:[%s42] sm:$0xff]
  %v44 = vld [vmem:[%s42 + $0x8] sm:$0xff]
  %v45 = vmul.f32 %v41, %v43
  %v46 = vmul.f32 %v40, %v44
  %47 = vst [vmem:[#allocation2 + $0x10] sm:$0xff] %v45
  %48 = vst [vmem:[#allocation2 + $0x18] sm:$0xff] %v46
  %49 = vrot.lane.b32.xlu0 %v18, 32
  %v50 = vpop.permute.xlu0 %49
  %51 = vrot.lane.b32.xlu0 %v19, 32
  %v52 = vpop.permute.xlu0 %51
  %vm53 = vcmp.lt.s32.totalorder %v25, 32
  %v54 = vsel %vm53, %v50, %v52
  %v55 = vsel %vm53, %v52, %v50
  %s56 = scalar_lea.vmem %s1, 32
  %v57 = vld [vmem:[%s56] sm:$0xff]
  %v58 = vld [vmem:[%s56 + $0x8] sm:$0xff]
  %v59 = vmul.f32 %v55, %v57
  %v60 = vmul.f32 %v54, %v58
  %61 = vst [vmem:[#allocation2 + $0x20] sm:$0xff] %v59
  %62 = vst [vmem:[#allocation2 + $0x28] sm:$0xff] %v60
  %63 = vrot.lane.b32.xlu0 %v18, 31
  %v64 = vpop.permute.xlu0 %63
  %65 = vrot.lane.b32.xlu0 %v19, 31
  %v66 = vpop.permute.xlu0 %65
  %vm67 = vcmp.lt.s32.totalorder %v25, 31
  %v68 = vsel %vm67, %v64, %v66
  %v69 = vsel %vm67, %v66, %v64
  %s70 = scalar_lea.vmem %s1, 48
  %v71 = vld [vmem:[%s70] sm:$0xff]
  %v72 = vld [vmem:[%s70 + $0x8] sm:$0xff]
  %v73 = vmul.f32 %v69, %v71
  %v74 = vmul.f32 %v68, %v72
  %75 = vst [vmem:[#allocation2 + $0x30] sm:$0xff] %v73
  %76 = vst [vmem:[#allocation2 + $0x38] sm:$0xff] %v74
  %77 = vrot.lane.b32.xlu0 %v18, 30
  %v78 = vpop.permute.xlu0 %77
  %79 = vrot.lane.b32.xlu0 %v19, 30
  %v80 = vpop.permute.xlu0 %79
  %vm81 = vcmp.lt.s32.totalorder %v25, 30
  %v82 = vsel %vm81, %v78, %v80
  %v83 = vsel %vm81, %v80, %v78
  %s84 = scalar_lea.vmem %s1, 64
  %v85 = vld [vmem:[%s84] sm:$0xff]
  %v86 = vld [vmem:[%s84 + $0x8] sm:$0xff]
  %v87 = vmul.f32 %v83, %v85
  %v88 = vmul.f32 %v82, %v86
  %89 = vst [vmem:[#allocation2 + $0x40] sm:$0xff] %v87
  %90 = vst [vmem:[#allocation2 + $0x48] sm:$0xff] %v88
  %91 = vrot.lane.b32.xlu0 %v18, 18
  %v92 = vpop.permute.xlu0 %91
  %93 = vrot.lane.b32.xlu0 %v19, 18
  %v94 = vpop.permute.xlu0 %93
  %vm95 = vcmp.lt.s32.totalorder %v25, 18
  %v96 = vsel %vm95, %v92, %v94
  %v97 = vsel %vm95, %v94, %v92
  %s98 = scalar_lea.vmem %s1, 80
  %v99 = vld [vmem:[%s98] sm:$0xff]
  %v100 = vld [vmem:[%s98 + $0x8] sm:$0xff]
  %v101 = vmul.f32 %v97, %v99
  %v102 = vmul.f32 %v96, %v100
  %103 = vst [vmem:[#allocation2 + $0x50] sm:$0xff] %v101
  %104 = vst [vmem:[#allocation2 + $0x58] sm:$0xff] %v102
  %105 = vrot.lane.b32.xlu0 %v18, 17
  %v106 = vpop.permute.xlu0 %105
  %107 = vrot.lane.b32.xlu0 %v19, 17
  %v108 = vpop.permute.xlu0 %107
  %vm109 = vcmp.lt.s32.totalorder %v25, 17
  %v110 = vsel %vm109, %v106, %v108
  %v111 = vsel %vm109, %v108, %v106
  %s112 = scalar_lea.vmem %s1, 96
  %v113 = vld [vmem:[%s112] sm:$0xff]
  %v114 = vld [vmem:[%s112 + $0x8] sm:$0xff]
  %v115 = vmul.f32 %v111, %v113
  %v116 = vmul.f32 %v110, %v114
  %117 = vst [vmem:[#allocation2 + $0x60] sm:$0xff] %v115
  %118 = vst [vmem:[#allocation2 + $0x68] sm:$0xff] %v116
  %s119 = scalar_lea.vmem %s1, 400
  %v120 = vld [vmem:[%s119] sm:$0xff]
  %v121 = vld [vmem:[%s119 + $0x8] sm:$0xff]
  %v122 = vadd.f32 %v115, %v120
  %v123 = vadd.f32 %v116, %v121
  %v124 = vmax.f32 %v18, %v122
  %v125 = vmax.f32 %v19, %v123
  %126 = vrot.lane.b32.xlu0 %v18, 16
  %v127 = vpop.permute.xlu0 %126
  %128 = vrot.lane.b32.xlu0 %v19, 16
  %v129 = vpop.permute.xlu0 %128
  %vm130 = vcmp.lt.s32.totalorder %v25, 16
  %v131 = vsel %vm130, %v127, %v129
  %v132 = vsel %vm130, %v129, %v127
  %s133 = scalar_lea.vmem %s1, 112
  %v134 = vld [vmem:[%s133] sm:$0xff]
  %v135 = vld [vmem:[%s133 + $0x8] sm:$0xff]
  %v136 = vmul.f32 %v132, %v134
  %v137 = vmul.f32 %v131, %v135
  %138 = vst [vmem:[#allocation2 + $0x70] sm:$0xff] %v136
  %139 = vst [vmem:[#allocation2 + $0x78] sm:$0xff] %v137
  %s140 = scalar_lea.vmem %s1, 416
  %v141 = vld [vmem:[%s140] sm:$0xff]
  %v142 = vld [vmem:[%s140 + $0x8] sm:$0xff]
  %v143 = vadd.f32 %v136, %v141
  %v144 = vadd.f32 %v137, %v142
  %v145 = vmax.f32 %v124, %v143
  %v146 = vmax.f32 %v125, %v144
  %147 = vrot.lane.b32.xlu0 %v18, 15
  %v148 = vpop.permute.xlu0 %147
  %149 = vrot.lane.b32.xlu0 %v19, 15
  %v150 = vpop.permute.xlu0 %149
  %vm151 = vcmp.lt.s32.totalorder %v25, 15
  %v152 = vsel %vm151, %v148, %v150
  %v153 = vsel %vm151, %v150, %v148
  %s154 = scalar_lea.vmem %s1, 128
  %v155 = vld [vmem:[%s154] sm:$0xff]
  %v156 = vld [vmem:[%s154 + $0x8] sm:$0xff]
  %v157 = vmul.f32 %v153, %v155
  %v158 = vmul.f32 %v152, %v156
  %159 = vst [vmem:[#allocation2 + $0x80] sm:$0xff] %v157
  %160 = vst [vmem:[#allocation2 + $0x88] sm:$0xff] %v158
  %s161 = scalar_lea.vmem %s1, 432
  %v162 = vld [vmem:[%s161] sm:$0xff]
  %v163 = vld [vmem:[%s161 + $0x8] sm:$0xff]
  %v164 = vadd.f32 %v157, %v162
  %v165 = vadd.f32 %v158, %v163
  %v166 = vmax.f32 %v145, %v164
  %v167 = vmax.f32 %v146, %v165
  %168 = vrot.lane.b32.xlu0 %v18, 14
  %v169 = vpop.permute.xlu0 %168
  %170 = vrot.lane.b32.xlu0 %v19, 14
  %v171 = vpop.permute.xlu0 %170
  %vm172 = vcmp.lt.s32.totalorder %v25, 14
  %v173 = vsel %vm172, %v169, %v171
  %v174 = vsel %vm172, %v171, %v169
  %s175 = scalar_lea.vmem %s1, 144
  %v176 = vld [vmem:[%s175] sm:$0xff]
  %v177 = vld [vmem:[%s175 + $0x8] sm:$0xff]
  %v178 = vmul.f32 %v174, %v176
  %v179 = vmul.f32 %v173, %v177
  %180 = vst [vmem:[#allocation2 + $0x90] sm:$0xff] %v178
  %181 = vst [vmem:[#allocation2 + $0x98] sm:$0xff] %v179
  %182 = vrot.lane.b32.xlu0 %v18, 2
  %v183 = vpop.permute.xlu0 %182
  %184 = vrot.lane.b32.xlu0 %v19, 2
  %v185 = vpop.permute.xlu0 %184
  %vm186 = vcmp.lt.s32.totalorder %v25, 2
  %v187 = vsel %vm186, %v183, %v185
  %v188 = vsel %vm186, %v185, %v183
  %s189 = scalar_lea.vmem %s1, 160
  %v190 = vld [vmem:[%s189] sm:$0xff]
  %v191 = vld [vmem:[%s189 + $0x8] sm:$0xff]
  %v192 = vmul.f32 %v188, %v190
  %v193 = vmul.f32 %v187, %v191
  %194 = vst [vmem:[#allocation2 + $0xa0] sm:$0xff] %v192
  %195 = vst [vmem:[#allocation2 + $0xa8] sm:$0xff] %v193
  %196 = vrot.lane.b32.xlu0 %v18, 1
  %v197 = vpop.permute.xlu0 %196
  %198 = vrot.lane.b32.xlu0 %v19, 1
  %v199 = vpop.permute.xlu0 %198
  %vm200 = vcmp.lt.s32.totalorder %v25, 1
  %v201 = vsel %vm200, %v197, %v199
  %v202 = vsel %vm200, %v199, %v197
  %s203 = scalar_lea.vmem %s1, 176
  %v204 = vld [vmem:[%s203] sm:$0xff]
  %v205 = vld [vmem:[%s203 + $0x8] sm:$0xff]
  %v206 = vmul.f32 %v202, %v204
  %v207 = vmul.f32 %v201, %v205
  %208 = vst [vmem:[#allocation2 + $0xb0] sm:$0xff] %v206
  %209 = vst [vmem:[#allocation2 + $0xb8] sm:$0xff] %v207
  %s210 = scalar_lea.vmem %s1, 448
  %v211 = vld [vmem:[%s210] sm:$0xff]
  %v212 = vld [vmem:[%s210 + $0x8] sm:$0xff]
  %v213 = vadd.f32 %v206, %v211
  %v214 = vadd.f32 %v207, %v212
  %v215 = vmax.f32 %v166, %v213
  %v216 = vmax.f32 %v167, %v214
  %217 = vst [vmem:[#allocation2 + $0xc0] sm:$0xff] %v18
  %218 = vst [vmem:[#allocation2 + $0xc8] sm:$0xff] %v19
  %219 = vrot.lane.b32.xlu0 %v18, 127
  %v220 = vpop.permute.xlu0 %219
  %221 = vrot.lane.b32.xlu0 %v19, 127
  %v222 = vpop.permute.xlu0 %221
  %vm223 = vcmp.lt.s32.totalorder %v25, 127
  %v224 = vsel %vm223, %v220, %v222
  %v225 = vsel %vm223, %v222, %v220
  %s226 = scalar_lea.vmem %s1, 208
  %v227 = vld [vmem:[%s226] sm:$0xff]
  %v228 = vld [vmem:[%s226 + $0x8] sm:$0xff]
  %v229 = vmul.f32 %v224, %v227
  %v230 = vmul.f32 %v225, %v228
  %231 = vst [vmem:[#allocation2 + $0xd0] sm:$0xff] %v229
  %232 = vst [vmem:[#allocation2 + $0xd8] sm:$0xff] %v230
  %s233 = scalar_lea.vmem %s1, 464
  %v234 = vld [vmem:[%s233] sm:$0xff]
  %v235 = vld [vmem:[%s233 + $0x8] sm:$0xff]
  %v236 = vadd.f32 %v229, %v234
  %v237 = vadd.f32 %v230, %v235
  %v238 = vmax.f32 %v215, %v236
  %v239 = vmax.f32 %v216, %v237
  %240 = vrot.lane.b32.xlu0 %v18, 126
  %v241 = vpop.permute.xlu0 %240
  %242 = vrot.lane.b32.xlu0 %v19, 126
  %v243 = vpop.permute.xlu0 %242
  %vm244 = vcmp.lt.s32.totalorder %v25, 126
  %v245 = vsel %vm244, %v241, %v243
  %v246 = vsel %vm244, %v243, %v241
  %s247 = scalar_lea.vmem %s1, 224
  %v248 = vld [vmem:[%s247] sm:$0xff]
  %v249 = vld [vmem:[%s247 + $0x8] sm:$0xff]
  %v250 = vmul.f32 %v245, %v248
  %v251 = vmul.f32 %v246, %v249
  %252 = vst [vmem:[#allocation2 + $0xe0] sm:$0xff] %v250
  %253 = vst [vmem:[#allocation2 + $0xe8] sm:$0xff] %v251
  %254 = vrot.lane.b32.xlu0 %v18, 114
  %v255 = vpop.permute.xlu0 %254
  %256 = vrot.lane.b32.xlu0 %v19, 114
  %v257 = vpop.permute.xlu0 %256
  %vm258 = vcmp.lt.s32.totalorder %v25, 114
  %v259 = vsel %vm258, %v255, %v257
  %v260 = vsel %vm258, %v257, %v255
  %s261 = scalar_lea.vmem %s1, 240
  %v262 = vld [vmem:[%s261] sm:$0xff]
  %v263 = vld [vmem:[%s261 + $0x8] sm:$0xff]
  %v264 = vmul.f32 %v259, %v262
  %v265 = vmul.f32 %v260, %v263
  %266 = vst [vmem:[#allocation2 + $0xf0] sm:$0xff] %v264
  %267 = vst [vmem:[#allocation2 + $0xf8] sm:$0xff] %v265
  %268 = vrot.lane.b32.xlu0 %v18, 113
  %v269 = vpop.permute.xlu0 %268
  %270 = vrot.lane.b32.xlu0 %v19, 113
  %v271 = vpop.permute.xlu0 %270
  %vm272 = vcmp.lt.s32.totalorder %v25, 113
  %v273 = vsel %vm272, %v269, %v271
  %v274 = vsel %vm272, %v271, %v269
  %s275 = scalar_lea.vmem %s1, 256
  %v276 = vld [vmem:[%s275] sm:$0xff]
  %v277 = vld [vmem:[%s275 + $0x8] sm:$0xff]
  %v278 = vmul.f32 %v273, %v276
  %v279 = vmul.f32 %v274, %v277
  %280 = vst [vmem:[#allocation2 + $0x100] sm:$0xff] %v278
  %281 = vst [vmem:[#allocation2 + $0x108] sm:$0xff] %v279
  %s282 = scalar_lea.vmem %s1, 480
  %v283 = vld [vmem:[%s282] sm:$0xff]
  %v284 = vld [vmem:[%s282 + $0x8] sm:$0xff]
  %v285 = vadd.f32 %v278, %v283
  %v286 = vadd.f32 %v279, %v284
  %v287 = vmax.f32 %v238, %v285
  %v288 = vmax.f32 %v239, %v286
  %289 = vrot.lane.b32.xlu0 %v18, 112
  %v290 = vpop.permute.xlu0 %289
  %291 = vrot.lane.b32.xlu0 %v19, 112
  %v292 = vpop.permute.xlu0 %291
  %vm293 = vcmp.lt.s32.totalorder %v25, 112
  %v294 = vsel %vm293, %v290, %v292
  %v295 = vsel %vm293, %v292, %v290
  %s296 = scalar_lea.vmem %s1, 272
  %v297 = vld [vmem:[%s296] sm:$0xff]
  %v298 = vld [vmem:[%s296 + $0x8] sm:$0xff]
  %v299 = vmul.f32 %v294, %v297
  %v300 = vmul.f32 %v295, %v298
  %301 = vst [vmem:[#allocation2 + $0x110] sm:$0xff] %v299
  %302 = vst [vmem:[#allocation2 + $0x118] sm:$0xff] %v300
  %s303 = scalar_lea.vmem %s1, 496
  %v304 = vld [vmem:[%s303] sm:$0xff]
  %v305 = vld [vmem:[%s303 + $0x8] sm:$0xff]
  %v306 = vadd.f32 %v299, %v304
  %v307 = vadd.f32 %v300, %v305
  %v308 = vmax.f32 %v287, %v306
  %v309 = vmax.f32 %v288, %v307
  %310 = vrot.lane.b32.xlu0 %v18, 111
  %v311 = vpop.permute.xlu0 %310
  %312 = vrot.lane.b32.xlu0 %v19, 111
  %v313 = vpop.permute.xlu0 %312
  %vm314 = vcmp.lt.s32.totalorder %v25, 111
  %v315 = vsel %vm314, %v311, %v313
  %v316 = vsel %vm314, %v313, %v311
  %s317 = scalar_lea.vmem %s1, 288
  %v318 = vld [vmem:[%s317] sm:$0xff]
  %v319 = vld [vmem:[%s317 + $0x8] sm:$0xff]
  %v320 = vmul.f32 %v315, %v318
  %v321 = vmul.f32 %v316, %v319
  %322 = vst [vmem:[#allocation2 + $0x120] sm:$0xff] %v320
  %323 = vst [vmem:[#allocation2 + $0x128] sm:$0xff] %v321
  %s324 = scalar_lea.vmem %s1, 512
  %v325 = vld [vmem:[%s324] sm:$0xff]
  %v326 = vld [vmem:[%s324 + $0x8] sm:$0xff]
  %v327 = vadd.f32 %v320, %v325
  %v328 = vadd.f32 %v321, %v326
  %v329 = vmax.f32 %v308, %v327
  %v330 = vmax.f32 %v309, %v328
  %331 = vrot.lane.b32.xlu0 %v18, 110
  %v332 = vpop.permute.xlu0 %331
  %333 = vrot.lane.b32.xlu0 %v19, 110
  %v334 = vpop.permute.xlu0 %333
  %vm335 = vcmp.lt.s32.totalorder %v25, 110
  %v336 = vsel %vm335, %v332, %v334
  %v337 = vsel %vm335, %v334, %v332
  %s338 = scalar_lea.vmem %s1, 304
  %v339 = vld [vmem:[%s338] sm:$0xff]
  %v340 = vld [vmem:[%s338 + $0x8] sm:$0xff]
  %v341 = vmul.f32 %v336, %v339
  %v342 = vmul.f32 %v337, %v340
  %343 = vst [vmem:[#allocation2 + $0x130] sm:$0xff] %v341
  %344 = vst [vmem:[#allocation2 + $0x138] sm:$0xff] %v342
  %345 = vrot.lane.b32.xlu0 %v18, 98
  %v346 = vpop.permute.xlu0 %345
  %347 = vrot.lane.b32.xlu0 %v19, 98
  %v348 = vpop.permute.xlu0 %347
  %vm349 = vcmp.lt.s32.totalorder %v25, 98
  %v350 = vsel %vm349, %v346, %v348
  %v351 = vsel %vm349, %v348, %v346
  %s352 = scalar_lea.vmem %s1, 320
  %v353 = vld [vmem:[%s352] sm:$0xff]
  %v354 = vld [vmem:[%s352 + $0x8] sm:$0xff]
  %v355 = vmul.f32 %v350, %v353
  %v356 = vmul.f32 %v351, %v354
  %357 = vst [vmem:[#allocation2 + $0x140] sm:$0xff] %v355
  %358 = vst [vmem:[#allocation2 + $0x148] sm:$0xff] %v356
  %359 = vrot.lane.b32.xlu0 %v18, 97
  %v360 = vpop.permute.xlu0 %359
  %361 = vrot.lane.b32.xlu0 %v19, 97
  %v362 = vpop.permute.xlu0 %361
  %vm363 = vcmp.lt.s32.totalorder %v25, 97
  %v364 = vsel %vm363, %v360, %v362
  %v365 = vsel %vm363, %v362, %v360
  %s366 = scalar_lea.vmem %s1, 336
  %v367 = vld [vmem:[%s366] sm:$0xff]
  %v368 = vld [vmem:[%s366 + $0x8] sm:$0xff]
  %v369 = vmul.f32 %v364, %v367
  %v370 = vmul.f32 %v365, %v368
  %371 = vst [vmem:[#allocation2 + $0x150] sm:$0xff] %v369
  %372 = vst [vmem:[#allocation2 + $0x158] sm:$0xff] %v370
  %373 = vrot.lane.b32.xlu0 %v18, 96
  %v374 = vpop.permute.xlu0 %373
  %375 = vrot.lane.b32.xlu0 %v19, 96
  %v376 = vpop.permute.xlu0 %375
  %vm377 = vcmp.lt.s32.totalorder %v25, 96
  %v378 = vsel %vm377, %v374, %v376
  %v379 = vsel %vm377, %v376, %v374
  %s380 = scalar_lea.vmem %s1, 352
  %v381 = vld [vmem:[%s380] sm:$0xff]
  %v382 = vld [vmem:[%s380 + $0x8] sm:$0xff]
  %v383 = vmul.f32 %v378, %v381
  %v384 = vmul.f32 %v379, %v382
  %385 = vst [vmem:[#allocation2 + $0x160] sm:$0xff] %v383
  %386 = vst [vmem:[#allocation2 + $0x168] sm:$0xff] %v384
  %387 = vrot.lane.b32.xlu0 %v18, 95
  %v388 = vpop.permute.xlu0 %387
  %389 = vrot.lane.b32.xlu0 %v19, 95
  %v390 = vpop.permute.xlu0 %389
  %vm391 = vcmp.lt.s32.totalorder %v25, 95
  %v392 = vsel %vm391, %v388, %v390
  %v393 = vsel %vm391, %v390, %v388
  %s394 = scalar_lea.vmem %s1, 368
  %v395 = vld [vmem:[%s394] sm:$0xff]
  %v396 = vld [vmem:[%s394 + $0x8] sm:$0xff]
  %v397 = vmul.f32 %v392, %v395
  %v398 = vmul.f32 %v393, %v396
  %399 = vst [vmem:[#allocation2 + $0x170] sm:$0xff] %v397
  %400 = vst [vmem:[#allocation2 + $0x178] sm:$0xff] %v398
  %401 = vrot.lane.b32.xlu0 %v18, 94
  %v402 = vpop.permute.xlu0 %401
  %403 = vrot.lane.b32.xlu0 %v19, 94
  %v404 = vpop.permute.xlu0 %403
  %vm405 = vcmp.lt.s32.totalorder %v25, 94
  %v406 = vsel %vm405, %v402, %v404
  %v407 = vsel %vm405, %v404, %v402
  %s408 = scalar_lea.vmem %s1, 384
  %v409 = vld [vmem:[%s408] sm:$0xff]
  %v410 = vld [vmem:[%s408 + $0x8] sm:$0xff]
  %v411 = vmul.f32 %v406, %v409
  %v412 = vmul.f32 %v407, %v410
  %413 = vst [vmem:[#allocation2 + $0x180] sm:$0xff] %v411
  %414 = vst [vmem:[#allocation2 + $0x188] sm:$0xff] %v412
  %v415 = vld [vmem:[%s3] sm:$0xff]
  %v416 = vld [vmem:[%s3 + $0x8] sm:$0xff]
  %v417 = vld [vmem:[#allocation2] sm:$0xff]
  %v418 = vld [vmem:[#allocation2 + $0x8] sm:$0xff]
  %v419 = vld [vmem:[#allocation2 + $0x10] sm:$0xff]
  %v420 = vld [vmem:[#allocation2 + $0x18] sm:$0xff]
  %v421 = vld [vmem:[#allocation2 + $0x20] sm:$0xff]
  %v422 = vld [vmem:[#allocation2 + $0x28] sm:$0xff]
  %v423 = vld [vmem:[#allocation2 + $0x30] sm:$0xff]
  %v424 = vld [vmem:[#allocation2 + $0x38] sm:$0xff]
  %v425 = vld [vmem:[#allocation2 + $0x40] sm:$0xff]
  %v426 = vld [vmem:[#allocation2 + $0x48] sm:$0xff]
  %v427 = vld [vmem:[#allocation2 + $0x50] sm:$0xff]
  %v428 = vld [vmem:[#allocation2 + $0x58] sm:$0xff]
  %v429 = vld [vmem:[#allocation2 + $0x60] sm:$0xff]
  %v430 = vld [vmem:[#allocation2 + $0x68] sm:$0xff]
  %v431 = vld [vmem:[#allocation2 + $0x70] sm:$0xff]
  %v432 = vld [vmem:[#allocation2 + $0x78] sm:$0xff]
  %v433 = vld [vmem:[#allocation2 + $0x80] sm:$0xff]
  %v434 = vld [vmem:[#allocation2 + $0x88] sm:$0xff]
  %v435 = vld [vmem:[#allocation2 + $0x90] sm:$0xff]
  %v436 = vld [vmem:[#allocation2 + $0x98] sm:$0xff]
  %v437 = vld [vmem:[#allocation2 + $0xa0] sm:$0xff]
  %v438 = vld [vmem:[#allocation2 + $0xa8] sm:$0xff]
  %v439 = vld [vmem:[#allocation2 + $0xb0] sm:$0xff]
  %v440 = vld [vmem:[#allocation2 + $0xb8] sm:$0xff]
  %v441 = vld [vmem:[#allocation2 + $0xc0] sm:$0xff]
  %v442 = vld [vmem:[#allocation2 + $0xc8] sm:$0xff]
  %v443 = vld [vmem:[#allocation2 + $0xd0] sm:$0xff]
  %v444 = vld [vmem:[#allocation2 + $0xd8] sm:$0xff]
  %v445 = vld [vmem:[#allocation2 + $0xe0] sm:$0xff]
  %v446 = vld [vmem:[#allocation2 + $0xe8] sm:$0xff]
  %v447 = vld [vmem:[#allocation2 + $0xf0] sm:$0xff]
  %v448 = vld [vmem:[#allocation2 + $0xf8] sm:$0xff]
  %v449 = vld [vmem:[#allocation2 + $0x100] sm:$0xff]
  %v450 = vld [vmem:[#allocation2 + $0x108] sm:$0xff]
  %v451 = vld [vmem:[#allocation2 + $0x110] sm:$0xff]
  %v452 = vld [vmem:[#allocation2 + $0x118] sm:$0xff]
  %v453 = vld [vmem:[#allocation2 + $0x120] sm:$0xff]
  %v454 = vld [vmem:[#allocation2 + $0x128] sm:$0xff]
  %v455 = vld [vmem:[#allocation2 + $0x130] sm:$0xff]
  %v456 = vld [vmem:[#allocation2 + $0x138] sm:$0xff]
  %v457 = vld [vmem:[#allocation2 + $0x140] sm:$0xff]
  %v458 = vld [vmem:[#allocation2 + $0x148] sm:$0xff]
  %v459 = vld [vmem:[#allocation2 + $0x150] sm:$0xff]
  %v460 = vld [vmem:[#allocation2 + $0x158] sm:$0xff]
  %v461 = vld [vmem:[#allocation2 + $0x160] sm:$0xff]
  %v462 = vld [vmem:[#allocation2 + $0x168] sm:$0xff]
  %v463 = vld [vmem:[#allocation2 + $0x170] sm:$0xff]
  %v464 = vld [vmem:[#allocation2 + $0x178] sm:$0xff]
  %v465 = vld [vmem:[#allocation2 + $0x180] sm:$0xff]
  %v466 = vld [vmem:[#allocation2 + $0x188] sm:$0xff]
  %s467 = sld [smem:[#allocation3]]
  %v468 = vstv %s467
  %v469 = vmul.f32 %v468, %v329
  %v470 = vmul.f32 %v468, %v330
  %vm471 = vcmask 588800
  %v473 = vsel %vm471, %v416, 0
  %475 = vmatprep.subr.mxu0 %v448
  %476 = vmatpush1.msra.mxu0 %v447
  %477 = vmatprep.subr.mxu0 %v446
  %478 = vmatpush1.msra.mxu0 %v445
  %479 = vmatprep.subr.mxu0 %v444
  %480 = vmatpush1.msra.mxu0 %v443
  %481 = vmatprep.subr.mxu0 %v442
  %482 = vmatpush1.msra.mxu0 %v441
  %483 = vmatprep.subr.mxu0 %v440
  %484 = vmatpush1.msra.mxu0 %v439
  %485 = vmatprep.subr.mxu0 %v438
  %486 = vmatpush1.msra.mxu0 %v437
  %487 = vmatprep.subr.mxu0 %v436
  %488 = vmatpush1.msra.mxu0 %v435
  %489 = vmatprep.subr.mxu0 %v434
  %490 = vmatpush1.msra.mxu0 %v433
  %491 = vmatprep.subr.mxu0 %v432
  %492 = vmatpush1.msra.mxu0 %v431
  %493 = vmatprep.subr.mxu0 %v430
  %494 = vmatpush1.msra.mxu0 %v429
  %495 = vmatprep.subr.mxu0 %v428
  %496 = vmatpush1.msra.mxu0 %v427
  %497 = vmatprep.subr.mxu0 %v426
  %498 = vmatpush1.msra.mxu0 %v425
  %499 = vmatprep.subr.mxu0 %v424
  %500 = vmatpush1.msra.mxu0 %v423
  %501 = vmatprep.subr.mxu0 %v422
  %502 = vmatpush1.msra.mxu0 %v421
  %503 = vmatprep.subr.mxu0 %v420
  %504 = vmatpush1.msra.mxu0 %v419
  %505 = vmatprep.subr.mxu0 %v418
  %506 = vmatpush1.msra.mxu0 %v417
  %507 = vmatprep.subr.mxu0 0.0
  %508 = vmatpush2.msra.mxu0 0.0
  %509 = vmatprep.subr.mxu0 0.0
  %510 = vmatpush2.msra.mxu0 0.0
  %511 = vmatprep.subr.mxu0 0.0
  %512 = vmatpush2.msra.mxu0 0.0
  %513 = vmatprep.subr.mxu0 0.0
  %514 = vmatpush2.msra.mxu0 0.0
  %515 = vmatprep.subr.mxu0 0.0
  %516 = vmatpush2.msra.mxu0 0.0
  %517 = vmatprep.subr.mxu0 0.0
  %518 = vmatpush2.msra.mxu0 0.0
  %519 = vmatprep.subr.mxu0 0.0
  %520 = vmatpush2.msra.mxu0 0.0
  %521 = vmatprep.subr.mxu0 %v466
  %522 = vmatpush2.msra.mxu0 %v465
  %523 = vmatprep.subr.mxu0 %v464
  %524 = vmatpush2.msra.mxu0 %v463
  %525 = vmatprep.subr.mxu0 %v462
  %526 = vmatpush2.msra.mxu0 %v461
  %527 = vmatprep.subr.mxu0 %v460
  %528 = vmatpush2.msra.mxu0 %v459
  %529 = vmatprep.subr.mxu0 %v458
  %530 = vmatpush2.msra.mxu0 %v457
  %531 = vmatprep.subr.mxu0 %v456
  %532 = vmatpush2.msra.mxu0 %v455
  %533 = vmatprep.subr.mxu0 %v454
  %534 = vmatpush2.msra.mxu0 %v453
  %535 = vmatprep.subr.mxu0 %v452
  %536 = vmatpush2.msra.mxu0 %v451
  %537 = vmatprep.subr.mxu0 %v450
  %538 = vmatpush2.msra.mxu0 %v449
  %539 = vmatprep.mubr.f32.mxu0 %v473
  %540 = vmatmul.mubr.f32.gmra.mxu0 %v415
  %v541 = vpop.f32.mrf.mxu0
  %v542 = vadd.f32 %v469, %v541
  %v543 = vpop.f32.mrf.mxu0
  %v544 = vadd.f32 %v470, %v543
  %545 = vdwg.mxu0
  %546 = vst [vmem:[%s4] sm:$0xff] %v542
  %547 = vst [vmem:[%s4 + $0x8] sm:$0xff] %v544
  // Predicated region
  $region18: #{_mixed_op_forward.1} parent=0 // pred_check
    _
  $region19: #{_mixed_op_forward.1} parent=0 // pred_check_branch
    %549 = sbr.rel (0) target = $region21
  $region20: #{_mixed_op_forward.1} parent=0 // pred_region
    _
  $region21: #{_mixed_op_forward.1} parent=0 // pred_fallthru
    _
  // Predicated region
  $region22: #{_mixed_op_forward.1} parent=0 // pred_check
    _
  $region23: #{_mixed_op_forward.1} parent=0 // pred_check_branch
    %551 = sbr.rel (0) target = $region25
  $region24: #{_mixed_op_forward.1} parent=0 // pred_region
    _
  $region25: #{_mixed_op_forward.1} parent=0 // pred_fallthru
    _

</llo_original>
